<compile_context>
chip_gen: v6e
topology: v6e:2x2x1
jax: 0.10.0
libtpu: 0.0.40
codegen_flags: <defaults>
</compile_context>

<pallas_src>
import functools

import numpy as np
import jax
import jax.numpy as jnp
from jax import lax
from jax.experimental import pallas as pl
from jax.experimental.pallas import tpu as pltpu

_LANE = 128
_MAX_TILE_ROWS = 512  # 512*128 elems/channel/tile -> pred tile = C * 256 KiB (f32)


def _spatial_sum(v):
    """(C, TR, L) -> (C, 1): reduce lanes, then rows, staying 2-D throughout."""
    s = jnp.sum(v, axis=2)                      # (C, TR)
    return jnp.sum(s, axis=1, keepdims=True)    # (C, 1)


def _dice_sums_kernel(pred_ref, target_ref, out_ref, *, total_elems, need_mask):
    # pred_ref:   (1, C, TR, 128)  logits in their native dtype
    # target_ref: (1, TR, 128)     int32 class indices in [0, C)
    # out_ref:    (1, C, 3)        cols = [intersection, sum(softmax), sum(one_hot)]
    k = pl.program_id(1)

    @pl.when(k == 0)
    def _init():
        out_ref[...] = jnp.zeros_like(out_ref)

    x = pred_ref[0].astype(jnp.float32)         # cast to f32 in VMEM only
    t = target_ref[0]                           # (TR, 128) int32
    C, TR, L = x.shape

    if need_mask:
        row = lax.broadcasted_iota(jnp.int32, (TR, L), 0) + k * TR
        col = lax.broadcasted_iota(jnp.int32, (TR, L), 1)
        valid = (row * L + col) < total_elems   # (TR, 128) bool
        x = jnp.where(valid[None], x, 0.0)      # neutralize pad / OOB lanes

    # Softmax over the channel axis (axis 0): elementwise across C dense tiles.
    m = jnp.max(x, axis=0, keepdims=True)
    e = jnp.exp(x - m)
    p = e / jnp.sum(e, axis=0, keepdims=True)   # (C, TR, 128) f32

    # one-hot(target) without a scatter: label_c = (target == c)
    cls = lax.broadcasted_iota(jnp.int32, (C, TR, L), 0)
    lab = t[None] == cls                        # (C, TR, 128) bool

    if need_mask:
        p = p * valid[None].astype(jnp.float32)
        lab = jnp.logical_and(lab, valid[None])
    labf = lab.astype(jnp.float32)

    inter = _spatial_sum(p * labf)              # (C, 1)
    s_in = _spatial_sum(p)                      # (C, 1)
    s_lab = _spatial_sum(labf)                  # (C, 1)

    # Store per-channel partial sums individually (no concatenates).
    out_ref[0, :, 0:1] = out_ref[0, :, 0:1] + inter
    out_ref[0, :, 1:2] = out_ref[0, :, 1:2] + s_in
    out_ref[0, :, 2:3] = out_ref[0, :, 2:3] + s_lab


def dice_loss(inputs, target, smooth=1.0, reduce="mean", detail=False):
    """inputs: (N, C, *spatial) logits; target: (N, *spatial) integer class ids."""
    N = inputs.shape[0]
    C = inputs.shape[1]
    S = int(np.prod(inputs.shape[2:]))

    R = pl.cdiv(S, _LANE)
    Sp = R * _LANE

    pred = inputs.reshape(N, C, S)              # keep native dtype in HBM (no up-cast)
    tgt = target.reshape(N, S).astype(jnp.int32)

    if Sp != S:
        # TODO(synk): for spatial sizes not a multiple of 128 this pad makes one
        # extra HBM copy of pred; a flat-S BlockSpec with the same in-kernel tail
        # mask would avoid it.  Pad values are irrelevant (masked in-kernel).
        pred = jnp.pad(pred, ((0, 0), (0, 0), (0, Sp - S)))
        tgt = jnp.pad(tgt, ((0, 0), (0, Sp - S)), constant_values=C)

    predr = pred.reshape(N, C, R, _LANE)        # lane-dense: last two dims (rows, 128)
    tgtr = tgt.reshape(N, R, _LANE)

    TR = R if R <= _MAX_TILE_ROWS else _MAX_TILE_ROWS
    K = pl.cdiv(R, TR)
    need_mask = (Sp != S) or (R % TR != 0)

    kernel = functools.partial(
        _dice_sums_kernel, total_elems=S, need_mask=need_mask)

    sums = pl.pallas_call(
        kernel,
        out_shape=jax.ShapeDtypeStruct((N, C, 3), jnp.float32),
        grid_spec=pltpu.PrefetchScalarGridSpec(
            num_scalar_prefetch=0,
            grid=(N, K),
            in_specs=[
                pl.BlockSpec((1, C, TR, _LANE), lambda n, k: (n, 0, k, 0)),
                pl.BlockSpec((1, TR, _LANE), lambda n, k: (n, k, 0)),
            ],
            out_specs=pl.BlockSpec((1, C, 3), lambda n, k: (n, 0, 0)),
        ),
        compiler_params=pltpu.CompilerParams(
            dimension_semantics=("parallel", "arbitrary")),
    )(predr, tgtr)

    inter = sums[..., 0]   # (N, C)
    s_in = sums[..., 1]    # (N, C)
    s_lab = sums[..., 2]   # (N, C)
    dice = (2.0 * inter + smooth) / (s_in + s_lab + smooth)

    if detail:
        return C * 1.0 - dice.sum(axis=1)
    elif reduce == "mean":
        return (C * 1.0 - dice.sum(axis=1)).mean()
    elif reduce == "sum":
        return N - dice.sum()  # matches the original module's 'sum' branch exactly
    else:
        raise ValueError(f"unknown reduce: {reduce}")


def _reference_loss(inputs, target, smooth=1.0):
    # Pure-JAX reference mirroring the PyTorch forward (reduce='mean').
    N, C = inputs.shape[0], inputs.shape[1]
    p = jax.nn.softmax(inputs.astype(jnp.float32), axis=1).reshape(N, C, -1)
    oh = jax.nn.one_hot(target.reshape(N, -1), C, axis=1, dtype=jnp.float32)
    inter = (p * oh).sum(axis=2)
    dice = (2.0 * inter + smooth) / (p.sum(axis=2) + oh.sum(axis=2) + smooth)
    return (C * 1.0 - dice.sum(axis=1)).mean()


if __name__ == "__main__":
    key = jax.random.PRNGKey(0)
    k_pred, k_tgt = jax.random.split(key)

    N, C, H, W = 2, 4, 16, 16
    inputs = jax.random.normal(k_pred, (N, C, H, W), dtype=jnp.float32)
    target = jax.random.randint(k_tgt, (N, H, W), 0, C, dtype=jnp.int32)

    loss = jax.block_until_ready(dice_loss(inputs, target, smooth=1.0, reduce="mean"))
    ref = jax.block_until_ready(_reference_loss(inputs, target, smooth=1.0))
    assert jnp.allclose(loss, ref, rtol=1e-5, atol=1e-5), (loss, ref)

    print("KERNEL_OK")
</pallas_src>

<mosaic_0001>
module attributes {stable_mosaic.version = 11 : i64} {
  func.func @_dice_sums_kernel(%arg0: i32, %arg1: i32, %arg2: memref<1x4x2x128xf32, #tpu.memory_space<vmem>>, %arg3: memref<1x2x128xi32, #tpu.memory_space<vmem>>, %arg4: memref<1x4x3xf32, #tpu.memory_space<vmem>>) attributes {dimension_semantics = [#tpu.dimension_semantics<parallel>, #tpu.dimension_semantics<arbitrary>], iteration_bounds = array<i64: 2, 1>, scalar_prefetch = 0 : i64, scratch_operands = 0 : i64, tpu.core_type = #tpu.core_type<tc>, window_params = [{transform_indices = @transform_0, window_bounds = array<i64: 1, 4, 2, 128>}, {transform_indices = @transform_1, window_bounds = array<i64: 1, 2, 128>}, {transform_indices = @transform_2, window_bounds = array<i64: 1, 4, 3>}]} {
    %c0_i32 = arith.constant 0 : i32
    %0 = arith.cmpi eq, %arg1, %c0_i32 : i32
    %1 = arith.extui %0 : i1 to i32
    %c0_i32_0 = arith.constant 0 : i32
    %2 = arith.cmpi ne, %1, %c0_i32_0 : i32
    scf.if %2 {
      %cst_30 = arith.constant 0.000000e+00 : f32
      %50 = vector.broadcast %cst_30 : f32 to vector<1x4x3xf32>
      %c0_31 = arith.constant 0 : index
      %c0_32 = arith.constant 0 : index
      %c0_33 = arith.constant 0 : index
      %51 = vector.load %arg4[%c0_31, %c0_32, %c0_33] : memref<1x4x3xf32, #tpu.memory_space<vmem>>, vector<1x4x3xf32>
      tpu.vector_store %arg4[%c0_31, %c0_32, %c0_33], %50 {strides = array<i32>} : memref<1x4x3xf32, #tpu.memory_space<vmem>>, vector<1x4x3xf32>,
    } else {
    }
    %c0 = arith.constant 0 : index
    %c0_1 = arith.constant 0 : index
    %c0_2 = arith.constant 0 : index
    %c0_3 = arith.constant 0 : index
    %3 = vector.load %arg2[%c0, %c0_1, %c0_2, %c0_3] : memref<1x4x2x128xf32, #tpu.memory_space<vmem>>, vector<1x4x2x128xf32>
    %4 = vector.shape_cast %3 : vector<1x4x2x128xf32> to vector<4x2x128xf32>
    %c0_4 = arith.constant 0 : index
    %c0_5 = arith.constant 0 : index
    %c0_6 = arith.constant 0 : index
    %5 = vector.load %arg3[%c0_4, %c0_5, %c0_6] : memref<1x2x128xi32, #tpu.memory_space<vmem>>, vector<1x2x128xi32>
    %6 = vector.shape_cast %5 : vector<1x2x128xi32> to vector<2x128xi32>
    %cst = arith.constant dense<0xFF800000> : vector<2x128xf32>
    %7 = vector.multi_reduction <maximumf>, %4, %cst [0] : vector<4x2x128xf32> to vector<2x128xf32>
    %8 = vector.shape_cast %7 : vector<2x128xf32> to vector<1x2x128xf32>
    %9 = vector.broadcast %8 : vector<1x2x128xf32> to vector<4x2x128xf32>
    %10 = arith.subf %4, %9 : vector<4x2x128xf32>
    %11 = math.exp %10 : vector<4x2x128xf32>
    %cst_7 = arith.constant dense<0.000000e+00> : vector<2x128xf32>
    %12 = vector.multi_reduction <add>, %11, %cst_7 [0] : vector<4x2x128xf32> to vector<2x128xf32>
    %13 = vector.shape_cast %12 : vector<2x128xf32> to vector<1x2x128xf32>
    %14 = vector.broadcast %13 : vector<1x2x128xf32> to vector<4x2x128xf32>
    %15 = arith.divf %11, %14 : vector<4x2x128xf32>
    %16 = tpu.iota {dimensions = array<i32: 0>} : vector<4x2x128xi32>
    %17 = vector.shape_cast %6 : vector<2x128xi32> to vector<1x2x128xi32>
    %18 = vector.broadcast %17 : vector<1x2x128xi32> to vector<4x2x128xi32>
    %19 = arith.cmpi eq, %18, %16 : vector<4x2x128xi32>
    %20 = arith.extui %19 : vector<4x2x128xi1> to vector<4x2x128xi32>
    %21 = arith.sitofp %20 : vector<4x2x128xi32> to vector<4x2x128xf32>
    %22 = arith.mulf %15, %21 : vector<4x2x128xf32>
    %cst_8 = arith.constant dense<0.000000e+00> : vector<4x2xf32>
    %23 = vector.multi_reduction <add>, %22, %cst_8 [2] : vector<4x2x128xf32> to vector<4x2xf32>
    %cst_9 = arith.constant dense<0.000000e+00> : vector<4xf32>
    %24 = vector.multi_reduction <add>, %23, %cst_9 [1] : vector<4x2xf32> to vector<4xf32>
    %25 = vector.shape_cast %24 : vector<4xf32> to vector<4x1xf32>
    %cst_10 = arith.constant dense<0.000000e+00> : vector<4x2xf32>
    %26 = vector.multi_reduction <add>, %15, %cst_10 [2] : vector<4x2x128xf32> to vector<4x2xf32>
    %cst_11 = arith.constant dense<0.000000e+00> : vector<4xf32>
    %27 = vector.multi_reduction <add>, %26, %cst_11 [1] : vector<4x2xf32> to vector<4xf32>
    %28 = vector.shape_cast %27 : vector<4xf32> to vector<4x1xf32>
    %cst_12 = arith.constant dense<0.000000e+00> : vector<4x2xf32>
    %29 = vector.multi_reduction <add>, %21, %cst_12 [2] : vector<4x2x128xf32> to vector<4x2xf32>
    %cst_13 = arith.constant dense<0.000000e+00> : vector<4xf32>
    %30 = vector.multi_reduction <add>, %29, %cst_13 [1] : vector<4x2xf32> to vector<4xf32>
    %31 = vector.shape_cast %30 : vector<4xf32> to vector<4x1xf32>
    %c0_14 = arith.constant 0 : index
    %c0_15 = arith.constant 0 : index
    %c0_16 = arith.constant 0 : index
    %32 = vector.load %arg4[%c0_14, %c0_15, %c0_16] : memref<1x4x3xf32, #tpu.memory_space<vmem>>, vector<1x4x1xf32>
    %33 = vector.shape_cast %32 : vector<1x4x1xf32> to vector<4x1xf32>
    %34 = arith.addf %33, %25 : vector<4x1xf32>
    %c0_17 = arith.constant 0 : index
    %c0_18 = arith.constant 0 : index
    %c0_19 = arith.constant 0 : index
    %35 = vector.load %arg4[%c0_17, %c0_18, %c0_19] : memref<1x4x3xf32, #tpu.memory_space<vmem>>, vector<1x4x1xf32>
    %36 = vector.shape_cast %35 : vector<1x4x1xf32> to vector<4x1xf32>
    %37 = vector.shape_cast %34 : vector<4x1xf32> to vector<1x4x1xf32>
    tpu.vector_store %arg4[%c0_17, %c0_18, %c0_19], %37 {strides = array<i32>} : memref<1x4x3xf32, #tpu.memory_space<vmem>>, vector<1x4x1xf32>,
    %c0_20 = arith.constant 0 : index
    %c0_21 = arith.constant 0 : index
    %c1 = arith.constant 1 : index
    %38 = vector.load %arg4[%c0_20, %c0_21, %c1] : memref<1x4x3xf32, #tpu.memory_space<vmem>>, vector<1x4x1xf32>
    %39 = vector.shape_cast %38 : vector<1x4x1xf32> to vector<4x1xf32>
    %40 = arith.addf %39, %28 : vector<4x1xf32>
    %c0_22 = arith.constant 0 : index
    %c0_23 = arith.constant 0 : index
    %c1_24 = arith.constant 1 : index
    %41 = vector.load %arg4[%c0_22, %c0_23, %c1_24] : memref<1x4x3xf32, #tpu.memory_space<vmem>>, vector<1x4x1xf32>
    %42 = vector.shape_cast %41 : vector<1x4x1xf32> to vector<4x1xf32>
    %43 = vector.shape_cast %40 : vector<4x1xf32> to vector<1x4x1xf32>
    tpu.vector_store %arg4[%c0_22, %c0_23, %c1_24], %43 {strides = array<i32>} : memref<1x4x3xf32, #tpu.memory_space<vmem>>, vector<1x4x1xf32>,
    %c0_25 = arith.constant 0 : index
    %c0_26 = arith.constant 0 : index
    %c2 = arith.constant 2 : index
    %44 = vector.load %arg4[%c0_25, %c0_26, %c2] : memref<1x4x3xf32, #tpu.memory_space<vmem>>, vector<1x4x1xf32>
    %45 = vector.shape_cast %44 : vector<1x4x1xf32> to vector<4x1xf32>
    %46 = arith.addf %45, %31 : vector<4x1xf32>
    %c0_27 = arith.constant 0 : index
    %c0_28 = arith.constant 0 : index
    %c2_29 = arith.constant 2 : index
    %47 = vector.load %arg4[%c0_27, %c0_28, %c2_29] : memref<1x4x3xf32, #tpu.memory_space<vmem>>, vector<1x4x1xf32>
    %48 = vector.shape_cast %47 : vector<1x4x1xf32> to vector<4x1xf32>
    %49 = vector.shape_cast %46 : vector<4x1xf32> to vector<1x4x1xf32>
    tpu.vector_store %arg4[%c0_27, %c0_28, %c2_29], %49 {strides = array<i32>} : memref<1x4x3xf32, #tpu.memory_space<vmem>>, vector<1x4x1xf32>,
    return
  }
  func.func @transform_0(%arg0: i32, %arg1: i32) -> (i32, i32, i32, i32) {
    %c0_i32 = arith.constant 0 : i32
    %c0_i32_0 = arith.constant 0 : i32
    %c0_i32_1 = arith.constant 0 : i32
    return %arg0, %c0_i32, %arg1, %c0_i32_0 : i32, i32, i32, i32
  }
  func.func @transform_1(%arg0: i32, %arg1: i32) -> (i32, i32, i32) {
    %c0_i32 = arith.constant 0 : i32
    %c0_i32_0 = arith.constant 0 : i32
    return %arg0, %arg1, %c0_i32 : i32, i32, i32
  }
  func.func @transform_2(%arg0: i32, %arg1: i32) -> (i32, i32, i32) {
    %c0_i32 = arith.constant 0 : i32
    %c0_i32_0 = arith.constant 0 : i32
    %c0_i32_1 = arith.constant 0 : i32
    return %arg0, %c0_i32, %c0_i32_0 : i32, i32, i32
  }
}

</mosaic_0001>

<llo_original>
// kernel: tpu_custom_call.1
$region0: #{tpu_custom_call.1}
  #allocation0 [shape = 'u32[]', space=smem, size = 0x4, offset = 0x4, fixed_abs, tag = 'smem constant byte address 0x4 - core index']
  #allocation1 [shape = 'u32[144,128]{1,0:T(1,128)}', space=vmem, size = 0x12000, scoped, tag = 'internal scratch']
  %s0 = inlined_call_operand.hbm [shape: f32[2,4,2,128], index: 0, kind: input, shape index: {}]
  %s1 = inlined_call_operand.hbm [shape: s32[2,2,128], index: 1, kind: input, shape index: {}]
  %s2 = inlined_call_operand.vmem [shape: f32[2,4,3], index: 2, kind: output, shape index: {}]
  %s3 = sld [smem:[#allocation0]]
  $region53: #{tpu_custom_call.1} parent=0
    _
  %s5 = ssub.s32 1, %s3
  %s6 = scalar_select 0, %s5, %s3
  $region1: #{tpu_custom_call.1} parent=0
    #allocation2 [shape = 'u8[8192]{0}', space=vmem, size = 0x2000, scoped, tag = 'input window, operand 0']
    #allocation3 [shape = 's32[2]{0}', space=sflag, size = 0x8, scoped, tag = 'scoped memory for tpu_custom_call.1']
    #allocation4 [shape = 'u8[2048]{0}', space=vmem, size = 0x800, scoped, tag = 'input window, operand 1']
    #allocation5 [shape = 's32[2]{0}', space=sflag, size = 0x8, scoped, tag = 'scoped memory for tpu_custom_call.1']
    %7 = vsyncpa [#allocation3], 0
    %s8 = scalar_lea.sflag [#allocation3], 1
    %9 = vsyncpa %s8, 0
    %10 = vsyncpa [#allocation5], 0
    %s11 = scalar_lea.sflag [#allocation5], 1
    %12 = vsyncpa %s11, 0
    loop: start=0, step=1, limit=4
    $region2: #{tpu_custom_call.1} parent=1 // loop_pre_header
      _
    $region3: #{tpu_custom_call.1} parent=1 // loop_header
      %s14 = sphi 0, %s18
      %p15 = scmp.ge.s32.totalorder %s14, 4
      %s21 = sphi 0, %s33
      %s22 = sphi 0, %s29
      %s23 = sphi 0, %s21
      %s24 = sphi 0, %s22
      %s25 = sphi 0, %s23
      %s26 = sphi 0, %s24
      %s38 = sphi 0, %s40
      %s41 = sphi 0, %s38
      %s42 = sphi 0, %s41
      %s58 = sphi 0, %s42
      %s66 = sphi 0, %s68
      %s69 = sphi 0, %s66
      %s70 = sphi 0, %s69
      %s86 = sphi 0, %s70
      %s92 = sphi 0, %s94
      %s95 = sphi 0, %s92
      %s96 = sphi 0, %s95
      %s112 = sphi 0, %s96
    $region4: #{tpu_custom_call.1} parent=1 // loop_header_branch
      %17 = sbr.rel (%p15) target = $region8
    $region5: #{tpu_custom_call.1} parent=1 // loop_body
      %s19 = ssub.s32 %s14, 1
      %s20 = ssub.s32 %s14, 2
      %s27 = sadd.s32 1, %s22
      %p28 = scmp.ge.s32.totalorder %s27, 1
      %s29 = scalar_select %p28, 0, %s27
      %s30 = sadd.s32 1, %s21
      %s31 = scalar_select %p28, %s30, %s21
      %p32 = scmp.ge.s32.totalorder %s31, 2
      %s33 = scalar_select %p32, 0, %s31
      %s34 = ssub.s32 %s21, %s33
      %s35 = ssub.s32 %s22, %s29
      %s36 = sor.u32 %s34, %s35
      %p37 = scmp.eq.s32.totalorder %s36, 0
      %s39 = sadd.s32 %s38, 1
      %s40 = scalar_select %p37, %s38, %s39
      %p43 = pneg %p37
      %p44 = scmp.eq.s32.totalorder %s14, 1
      %p45 = por %p43, %p44
      %p46 = scmp.ne.s32.totalorder %s38, %s41
      %p47 = scmp.eq.s32.totalorder %s14, 0
      %p48 = por %p46, %p47
      %p49 = scmp.ne.s32.totalorder %s38, %s41
      %p50 = scmp.eq.s32.totalorder %s19, 1
      %p51 = por %p49, %p50
      %p52 = scmp.ne.s32.totalorder %s41, %s42
      %p53 = scmp.eq.s32.totalorder %s19, 0
      %p54 = por %p52, %p53
      %p55 = scmp.ne.s32.totalorder %s41, %s42
      %p56 = scmp.eq.s32.totalorder %s20, 1
      %p57 = por %p55, %p56
      %p59 = scmp.ne.s32.totalorder %s42, %s58
      %p60 = scmp.eq.s32.totalorder %s20, 0
      %p61 = por %p59, %p60
      %s62 = ssub.s32 %s21, %s33
      %s63 = ssub.s32 %s22, %s29
      %s64 = sor.u32 %s62, %s63
      %p65 = scmp.eq.s32.totalorder %s64, 0
      %s67 = sadd.s32 %s66, 1
      %s68 = scalar_select %p65, %s66, %s67
      %p71 = pneg %p65
      %p72 = scmp.eq.s32.totalorder %s14, 1
      %p73 = por %p71, %p72
      %p74 = scmp.ne.s32.totalorder %s66, %s69
      %p75 = scmp.eq.s32.totalorder %s14, 0
      %p76 = por %p74, %p75
      %p77 = scmp.ne.s32.totalorder %s66, %s69
      %p78 = scmp.eq.s32.totalorder %s19, 1
      %p79 = por %p77, %p78
      %p80 = scmp.ne.s32.totalorder %s69, %s70
      %p81 = scmp.eq.s32.totalorder %s19, 0
      %p82 = por %p80, %p81
      %p83 = scmp.ne.s32.totalorder %s69, %s70
      %p84 = scmp.eq.s32.totalorder %s20, 1
      %p85 = por %p83, %p84
      %p87 = scmp.ne.s32.totalorder %s70, %s86
      %p88 = scmp.eq.s32.totalorder %s20, 0
      %p89 = por %p87, %p88
      %s90 = ssub.s32 %s21, %s33
      %p91 = scmp.eq.s32.totalorder %s90, 0
      %s93 = sadd.s32 %s92, 1
      %s94 = scalar_select %p91, %s92, %s93
      %p97 = pneg %p91
      %p98 = scmp.eq.s32.totalorder %s14, 1
      %p99 = por %p97, %p98
      %p100 = scmp.ne.s32.totalorder %s92, %s95
      %p101 = scmp.eq.s32.totalorder %s14, 0
      %p102 = por %p100, %p101
      %p103 = scmp.ne.s32.totalorder %s92, %s95
      %p104 = scmp.eq.s32.totalorder %s19, 1
      %p105 = por %p103, %p104
      %p106 = scmp.ne.s32.totalorder %s95, %s96
      %p107 = scmp.eq.s32.totalorder %s19, 0
      %p108 = por %p106, %p107
      %p109 = scmp.ne.s32.totalorder %s95, %s96
      %p110 = scmp.eq.s32.totalorder %s20, 1
      %p111 = por %p109, %p110
      %p113 = scmp.ne.s32.totalorder %s96, %s112
      %p114 = scmp.eq.s32.totalorder %s20, 0
      %p115 = por %p113, %p114
      %p116 = scmp.le.s32.totalorder 1, %s14
      %p117 = scmp.lt.s32.totalorder %s14, 3
      %p118 = pnand %p116, %p117
      %p119 = pneg %p118
      // Predicated region
      $region9: #{tpu_custom_call.1} parent=5 // pred_check
        _
      $region10: #{tpu_custom_call.1} parent=5 // pred_check_branch
        %121 = sbr.rel (%p118) target = $region12
      $region11: #{tpu_custom_call.1} parent=5 // pred_region
        %s122 = ssub.s32 %s14, 1
      $region12: #{tpu_custom_call.1} parent=5 // pred_fallthru
        _
      %p123 = scmp.lt.s32.totalorder %s14, 2
      // Predicated region
      $region13: #{tpu_custom_call.1} parent=5 // pred_check
        %p124 = pneg %p123
      $region14: #{tpu_custom_call.1} parent=5 // pred_check_branch
        %126 = sbr.rel (%p124) target = $region16
      $region15: #{tpu_custom_call.1} parent=5 // pred_region
        // Predicated region
        $region17: #{tpu_custom_call.1} parent=15 // pred_check
          %p127 = pneg %p48
        $region18: #{tpu_custom_call.1} parent=15 // pred_check_branch
          %129 = sbr.rel (%p127) target = $region20
        $region19: #{tpu_custom_call.1} parent=15 // pred_region
          %s130 = sand.u32 %s38, 1
          %s131 = scalar_lea.sflag [#allocation3], %s130
          %s132 = sand.u32 %s38, 1
          %s133 = smul.addr %s132, 8
          %s134 = scalar_lea.vmem [#allocation2], %s133
          %s136 = ssub.s32 128, 128
          %137 = vsyncadd %s131, %s136
          %s138 = smul.addr %s21, 4
          %s139 = sadd.s32 %s22, %s138
          %s140 = smul.addr %s139, 32
          %s141 = scalar_lea.hbm %s0, %s140
          %s142 = sshll.u32 %s134, 4
          %s143 = int_to_ptr.vmem [resolvable:$true] %s142
          %148 = dma.hbm_to_vmem [thread:$0]  %s141, 128, %s143, %s131, 32, 32, 2
        $region20: #{tpu_custom_call.1} parent=15 // pred_fallthru
          _
        // Predicated region
        $region21: #{tpu_custom_call.1} parent=15 // pred_check
          %p149 = pneg %p76
        $region22: #{tpu_custom_call.1} parent=15 // pred_check_branch
          %151 = sbr.rel (%p149) target = $region24
        $region23: #{tpu_custom_call.1} parent=15 // pred_region
          %s152 = sand.u32 %s66, 1
          %s153 = scalar_lea.sflag [#allocation5], %s152
          %s154 = sand.u32 %s66, 1
          %s155 = smul.addr %s154, 2
          %s156 = scalar_lea.vmem [#allocation4], %s155
          %s158 = ssub.s32 32, 32
          %159 = vsyncadd %s153, %s158
          %s160 = sadd.s32 %s22, %s21
          %s161 = smul.addr %s160, 32
          %s162 = scalar_lea.hbm %s1, %s161
          %s164 = sshll.u32 %s156, 4
          %s165 = int_to_ptr.vmem [resolvable:$true] %s164
          %167 = dma.hbm_to_vmem [thread:$0]  %s162, 32, %s165, %s153
        $region24: #{tpu_custom_call.1} parent=15 // pred_fallthru
          _
      $region16: #{tpu_custom_call.1} parent=5 // pred_fallthru
        _
      %p168 = scmp.le.s32.totalorder 1, %s14
      %p169 = scmp.lt.s32.totalorder %s14, 3
      %p170 = pnand %p168, %p169
      %p171 = pneg %p170
      // Predicated region
      $region25: #{tpu_custom_call.1} parent=5 // pred_check
        _
      $region26: #{tpu_custom_call.1} parent=5 // pred_check_branch
        %173 = sbr.rel (%p170) target = $region28
      $region27: #{tpu_custom_call.1} parent=5 // pred_region
        %s174 = ssub.s32 %s14, 1
        %s175 = sand.u32 %s41, 1
        %s176 = scalar_lea.sflag [#allocation3], %s175
        %s177 = sand.u32 %s41, 1
        %s178 = smul.addr %s177, 8
        %s179 = scalar_lea.vmem [#allocation2], %s178
        // Predicated region
        $region29: #{tpu_custom_call.1} parent=27 // pred_check
          %p180 = pneg %p54
        $region30: #{tpu_custom_call.1} parent=27 // pred_check_branch
          %182 = sbr.rel (%p180) target = $region32
        $region31: #{tpu_custom_call.1} parent=27 // pred_region
          %183 = dma.done %s176, 128
        $region32: #{tpu_custom_call.1} parent=27 // pred_fallthru
          _
        %s184 = sand.u32 %s69, 1
        %s185 = scalar_lea.sflag [#allocation5], %s184
        %s186 = sand.u32 %s69, 1
        %s187 = smul.addr %s186, 2
        %s188 = scalar_lea.vmem [#allocation4], %s187
        // Predicated region
        $region33: #{tpu_custom_call.1} parent=27 // pred_check
          %p189 = pneg %p82
        $region34: #{tpu_custom_call.1} parent=27 // pred_check_branch
          %191 = sbr.rel (%p189) target = $region36
        $region35: #{tpu_custom_call.1} parent=27 // pred_region
          %192 = dma.done %s185, 32
        $region36: #{tpu_custom_call.1} parent=27 // pred_fallthru
          _
        %s193 = sand.u32 %s41, 1
        %s194 = scalar_lea.sflag [#allocation3], %s193
        %s195 = sand.u32 %s41, 1
        %s196 = smul.addr %s195, 8
        %s197 = scalar_lea.vmem [#allocation2], %s196
        %p198 = pneg %p54
        %p199 = pneg %p51
        %s200 = sand.u32 %s69, 1
        %s201 = scalar_lea.sflag [#allocation5], %s200
        %s202 = sand.u32 %s69, 1
        %s203 = smul.addr %s202, 2
        %s204 = scalar_lea.vmem [#allocation4], %s203
        %p205 = pneg %p82
        %p206 = pneg %p79
        %p207 = pneg %p108
        %p208 = pneg %p105
        %p209 = scmp.lt.s32.totalorder %s23, 1
        %s210 = scalar_select %p209, %s23, 1
        %s211 = smul.addr %s210, 4
        %s212 = scalar_lea.vmem %s2, %s211
        %p213 = scmp.lt.s32.totalorder %s23, 1
        %s214 = scalar_select %p213, %s23, 1
        %s215 = smul.addr %s214, 4
        %s216 = scalar_lea.vmem %s2, %s215
        %p217 = scmp.eq.s32.totalorder %s24, 0
        // Predicated region
        $region37: #{tpu_custom_call.1} parent=27 // pred_check
          %p218 = pneg %p217
        $region38: #{tpu_custom_call.1} parent=27 // pred_check_branch
          %220 = sbr.rel (%p218) target = $region40
        $region39: #{tpu_custom_call.1} parent=27 // pred_region
          %vm221 = vcmask 19456
          %222 = vst.msk [vmem:[%s216] sm:$0xf] %vm221, 0.0
        $region40: #{tpu_custom_call.1} parent=27 // pred_fallthru
          _
        %v223 = vld [vmem:[%s179] sm:$0x3]
        %v224 = vld [vmem:[%s179 + $0x2] sm:$0x3]
        %v225 = vld [vmem:[%s179 + $0x4] sm:$0x3]
        %v226 = vld [vmem:[%s179 + $0x6] sm:$0x3]
        %v227 = vld [vmem:[%s188] sm:$0x3]
        %vm228 = vcmask 1041408
        %v229 = vsel %vm228, %v223, -inf
        %v230 = vsel %vm228, %v224, -inf
        %v231 = vsel %vm228, %v225, -inf
        %v232 = vsel %vm228, %v226, -inf
        %v233 = vmax.f32 %v229, %v230
        %v234 = vmax.f32 %v231, %v232
        %v235 = vmax.f32 %v233, %v234
        %v236 = vsub.f32 %v223, %v235
        %v237 = vsub.f32 %v224, %v235
        %v238 = vsub.f32 %v225, %v235
        %v239 = vsub.f32 %v226, %v235
        %v240 = vmul.f32 %v236, 1.442695
        %v241 = vpow.pop %v240
        %v242 = vmul.f32 %v237, 1.442695
        %v243 = vpow.pop %v242
        %v244 = vmul.f32 %v238, 1.442695
        %v245 = vpow.pop %v244
        %v246 = vmul.f32 %v239, 1.442695
        %v247 = vpow.pop %v246
        %v248 = vsel %vm228, %v241, 0.0
        %v249 = vsel %vm228, %v243, 0.0
        %v250 = vadd.f32 %v248, %v249
        %v251 = vsel %vm228, %v245, 0.0
        %v252 = vadd.f32 %v250, %v251
        %v253 = vsel %vm228, %v247, 0.0
        %v254 = vadd.f32 %v252, %v253
        %v255 = vrcp.pop %v254
        %v256 = vmul.f32 %v241, %v255
        %v257 = vmul.f32 %v243, %v255
        %v258 = vmul.f32 %v245, %v255
        %v259 = vmul.f32 %v247, %v255
        %vm260 = vcmp.eq.s32.totalorder %v227, 0
        %vm261 = vcmp.eq.s32.totalorder %v227, 1
        %vm262 = vcmp.eq.s32.totalorder %v227, 2
        %vm263 = vcmp.eq.s32.totalorder %v227, 3
        %v264 = vsel %vm260, 1, 0
        %v265 = vsel %vm261, 1, 0
        %v266 = vsel %vm262, 1, 0
        %v267 = vsel %vm263, 1, 0
        %v268 = vcvt.s32.f32 %v264
        %v269 = vcvt.s32.f32 %v265
        %v270 = vcvt.s32.f32 %v266
        %v271 = vcvt.s32.f32 %v267
        %v272 = vmul.f32 %v256, %v268
        %v273 = vmul.f32 %v257, %v269
        %v274 = vmul.f32 %v258, %v270
        %v275 = vmul.f32 %v259, %v271
        %v276 = vsel %vm228, %v272, 0.0
        %277 = vadd.xlane.f32.xlu0 %v276
        %v278 = vpop.xlane.xlu0 %277
        %v279 = vsel %vm228, %v273, 0.0
        %280 = vadd.xlane.f32.xlu0 %v279
        %v281 = vpop.xlane.xlu0 %280
        %v282 = vsel %vm228, %v274, 0.0
        %283 = vadd.xlane.f32.xlu0 %v282
        %v284 = vpop.xlane.xlu0 %283
        %v285 = vsel %vm228, %v275, 0.0
        %286 = vadd.xlane.f32.xlu0 %v285
        %v287 = vpop.xlane.xlu0 %286
        %v292 = vlaneseq
        %v293 = vand.u32 %v292, 127
        %v294 = vlaneseq
        %v295 = vshrl.u32 %v294, 7
        %v296 = vsub.s32 %v293, %v295
        %v297 = vrot.slane %v278, %v296
        %v298 = vlaneseq
        %v299 = vshrl.u32 %v298, 7
        %v300 = vsub.s32 %v293, %v299
        %v301 = vrot.slane %v281, %v300
        %v302 = vlaneseq
        %v303 = vshrl.u32 %v302, 7
        %v304 = vsub.s32 %v293, %v303
        %v305 = vrot.slane %v284, %v304
        %v306 = vlaneseq
        %v307 = vshrl.u32 %v306, 7
        %v308 = vsub.s32 %v293, %v307
        %v309 = vrot.slane %v287, %v308
        %vm310 = vcmask 1041409
        %v311 = vsel %vm310, %v301, %v297
        %vm312 = vcmask 1042434
        %v313 = vsel %vm312, %v305, %v311
        %vm314 = vcmask 1043459
        %v315 = vsel %vm314, %v309, %v313
        %vm317 = vcmask 11264
        %v318 = vsel %vm317, %v315, 0.0
        %319 = vadd.xlane.f32.xlu0 %v318
        %v320 = vpop.xlane.xlu0 %319
        %v321 = vsel %vm228, %v256, 0.0
        %322 = vadd.xlane.f32.xlu0 %v321
        %v323 = vpop.xlane.xlu0 %322
        %v324 = vsel %vm228, %v257, 0.0
        %325 = vadd.xlane.f32.xlu0 %v324
        %v326 = vpop.xlane.xlu0 %325
        %v327 = vsel %vm228, %v258, 0.0
        %328 = vadd.xlane.f32.xlu0 %v327
        %v329 = vpop.xlane.xlu0 %328
        %v330 = vsel %vm228, %v259, 0.0
        %331 = vadd.xlane.f32.xlu0 %v330
        %v332 = vpop.xlane.xlu0 %331
        %v337 = vlaneseq
        %v338 = vshrl.u32 %v337, 7
        %v339 = vsub.s32 %v293, %v338
        %v340 = vrot.slane %v323, %v339
        %v341 = vlaneseq
        %v342 = vshrl.u32 %v341, 7
        %v343 = vsub.s32 %v293, %v342
        %v344 = vrot.slane %v326, %v343
        %v345 = vlaneseq
        %v346 = vshrl.u32 %v345, 7
        %v347 = vsub.s32 %v293, %v346
        %v348 = vrot.slane %v329, %v347
        %v349 = vlaneseq
        %v350 = vshrl.u32 %v349, 7
        %v351 = vsub.s32 %v293, %v350
        %v352 = vrot.slane %v332, %v351
        %v353 = vsel %vm310, %v344, %v340
        %v354 = vsel %vm312, %v348, %v353
        %v355 = vsel %vm314, %v352, %v354
        %v357 = vsel %vm317, %v355, 0.0
        %358 = vadd.xlane.f32.xlu0 %v357
        %v359 = vpop.xlane.xlu0 %358
        %v360 = vsel %vm228, %v268, 0.0
        %361 = vadd.xlane.f32.xlu0 %v360
        %v362 = vpop.xlane.xlu0 %361
        %v363 = vsel %vm228, %v269, 0.0
        %364 = vadd.xlane.f32.xlu0 %v363
        %v365 = vpop.xlane.xlu0 %364
        %v366 = vsel %vm228, %v270, 0.0
        %367 = vadd.xlane.f32.xlu0 %v366
        %v368 = vpop.xlane.xlu0 %367
        %v369 = vsel %vm228, %v271, 0.0
        %370 = vadd.xlane.f32.xlu0 %v369
        %v371 = vpop.xlane.xlu0 %370
        %v376 = vlaneseq
        %v377 = vshrl.u32 %v376, 7
        %v378 = vsub.s32 %v293, %v377
        %v379 = vrot.slane %v362, %v378
        %v380 = vlaneseq
        %v381 = vshrl.u32 %v380, 7
        %v382 = vsub.s32 %v293, %v381
        %v383 = vrot.slane %v365, %v382
        %v384 = vlaneseq
        %v385 = vshrl.u32 %v384, 7
        %v386 = vsub.s32 %v293, %v385
        %v387 = vrot.slane %v368, %v386
        %v388 = vlaneseq
        %v389 = vshrl.u32 %v388, 7
        %v390 = vsub.s32 %v293, %v389
        %v391 = vrot.slane %v371, %v390
        %v392 = vsel %vm310, %v383, %v379
        %v393 = vsel %vm312, %v387, %v392
        %v394 = vsel %vm314, %v391, %v393
        %v396 = vsel %vm317, %v394, 0.0
        %397 = vadd.xlane.f32.xlu0 %v396
        %v398 = vpop.xlane.xlu0 %397
        %v399 = vld [vmem:[%s216] sm:$0xf]
        %v400 = vadd.f32 %v399, %v320
        %vm401 = vcmask 3072
        %402 = vst.msk [vmem:[%s216] sm:$0xf] %vm401, %v400
        %v403 = vld [vmem:[%s216] sm:$0xf]
        %v404 = vadd.f32 %v403, %v359
        %vm405 = vcmask 11272
        %406 = vst.msk [vmem:[%s216] sm:$0xf] %vm405, %v404
        %v407 = vld [vmem:[%s216] sm:$0xf]
        %v408 = vadd.f32 %v407, %v398
        %vm409 = vcmask 19472
        %410 = vst.msk [vmem:[%s216] sm:$0xf] %vm409, %v408
        %p411 = scmp.lt.s32.totalorder %s23, 1
        %s412 = scalar_select %p411, %s23, 1
        %s413 = smul.addr %s412, 4
        %s414 = scalar_lea.vmem %s2, %s413
        // Predicated region
        $region41: #{tpu_custom_call.1} parent=27 // pred_check
          %p415 = pneg %p105
        $region42: #{tpu_custom_call.1} parent=27 // pred_check_branch
          %417 = sbr.rel (%p415) target = $region44
        $region43: #{tpu_custom_call.1} parent=27 // pred_region
          _
        $region44: #{tpu_custom_call.1} parent=27 // pred_fallthru
          _
      $region28: #{tpu_custom_call.1} parent=5 // pred_fallthru
        _
      %p418 = scmp.le.s32.totalorder 2, %s14
      // Predicated region
      $region45: #{tpu_custom_call.1} parent=5 // pred_check
        %p419 = pneg %p418
      $region46: #{tpu_custom_call.1} parent=5 // pred_check_branch
        %421 = sbr.rel (%p419) target = $region48
      $region47: #{tpu_custom_call.1} parent=5 // pred_region
        %s422 = ssub.s32 %s14, 2
        // Predicated region
        $region49: #{tpu_custom_call.1} parent=47 // pred_check
          %p423 = pneg %p111
        $region50: #{tpu_custom_call.1} parent=47 // pred_check_branch
          %425 = sbr.rel (%p423) target = $region52
        $region51: #{tpu_custom_call.1} parent=47 // pred_region
          %p426 = scmp.lt.s32.totalorder %s25, 1
          %s427 = scalar_select %p426, %s25, 1
          %s428 = smul.addr %s427, 4
          %s429 = scalar_lea.vmem %s2, %s428
        $region52: #{tpu_custom_call.1} parent=47 // pred_fallthru
          _
      $region48: #{tpu_custom_call.1} parent=5 // pred_fallthru
        _
    $region6: #{tpu_custom_call.1} parent=1 // loop_footer
      %s18 = sadd.s32 1, %s14
    $region7: #{tpu_custom_call.1} parent=1 // loop_footer_branch
      %13 = sbr.rel target = $region3
    $region8: #{tpu_custom_call.1} parent=1 // loop_exit
      _
    %430 = vsyncpa [#allocation3], 1
    %s431 = scalar_lea.sflag [#allocation3], 1
    %432 = vsyncpa %s431, 1
    %433 = vsyncpa [#allocation5], 1
    %s434 = scalar_lea.sflag [#allocation5], 1
    %435 = vsyncpa %s434, 1

</llo_original>
